<compile_context>
chip_gen: v6e
topology: v6e:2x2x1
jax: 0.10.0
libtpu: 0.0.40
codegen_flags: <defaults>
</compile_context>

<pallas_src>
import jax
import jax.numpy as jnp
from jax.experimental import pallas as pl
from jax.experimental.pallas import tpu as pltpu


def _round_up(a, b):
    return (a + b - 1) // b * b


def attention_block_kernel(g_ref, x_ref, wg_ref, wx_ref, bgx_ref,
                           wpsi_ref, bpsi_ref, out_ref):
    # Channel-major, lane-dense blocks:
    #   g_ref  : (nb, F_g, T)   x_ref : (nb, F_l, T)   out_ref : (nb, F_l, T)
    #   wg     : (F_int, F_g)   wx    : (F_int, F_l)   (activation dtype)
    #   bgx    : (F_int, 1)     wpsi  : (F_int, 1)     bpsi : (1, 1)   (f32)
    wg = wg_ref[...]
    wx = wx_ref[...]
    bgx = bgx_ref[...]
    wpsi = wpsi_ref[...]
    bpsi = bpsi_ref[...]

    # Static unroll over the (small) batch sub-block: every matmul stays a
    # plain 2-D MXU dot (no in-kernel batched-einsum relayouts).
    for b in range(g_ref.shape[0]):
        xb = x_ref[b]                                              # (F_l, T)
        # Fused projections: one f32 accumulator, single pre-folded bias.
        acc = jnp.dot(wg, g_ref[b], preferred_element_type=jnp.float32)
        acc = acc + jnp.dot(wx, xb, preferred_element_type=jnp.float32)
        h = jnp.maximum(acc + bgx, 0.0)                            # (F_int, T) f32
        # psi: channel reduction on VPU/XLU (sublane sum), not an M=1 matmul.
        psi = jax.nn.sigmoid(jnp.sum(h * wpsi, axis=0, keepdims=True) + bpsi)
        out_ref[b] = (xb.astype(jnp.float32) * psi).astype(out_ref.dtype)


def attention_block(g, x, params, *, tile_pixels=2048):
    """g: (N, F_g, H, W), x: (N, F_l, H, W)  ->  (N, F_l, H, W)"""
    N, F_g, H, W = g.shape
    Nx, F_l, Hx, Wx = x.shape
    assert (N, H, W) == (Nx, Hx, Wx)
    F_int = params["wg"].shape[0]
    HW = H * W
    act_dtype = x.dtype

    # Channel-major views: NCHW -> (N, C, H*W) is a free reshape (no transpose,
    # no HBM copies). No padding / slicing anywhere in the wrapper.
    g_p = g.reshape(N, F_g, HW)
    x_p = x.reshape(N, F_l, HW)

    # Lane tile: multiple of 128; a single tile if the whole image fits.
    tile_hw = min(_round_up(tile_pixels, 128), _round_up(HW, 128))
    num_hw_tiles = pl.cdiv(HW, tile_hw)

    # Pack several batch images per grid step when images are small, amortizing
    # the fixed per-step overhead. nb divides N exactly (no masking on the
    # leading dim); capped at 8 to bound static unrolling.
    target_nb = max(1, _round_up(tile_pixels, 128) // tile_hw)
    nb = 1
    for cand in range(min(N, target_nb, 8), 0, -1):
        if N % cand == 0:
            nb = cand
            break
    grid = (N // nb, num_hw_tiles)

    # Weights travel in the activation dtype (full-rate bf16 MXU when inputs
    # are bf16); biases stay f32 and are added to the f32 accumulator.
    wg = params["wg"].astype(act_dtype)
    wx = params["wx"].astype(act_dtype)
    bgx = (params["bg"] + params["bx"]).astype(jnp.float32).reshape(F_int, 1)
    wpsi = params["wpsi"].astype(jnp.float32).reshape(F_int, 1)
    bpsi = params["bpsi"].astype(jnp.float32).reshape(1, 1)

    def pix_spec(c):
        return pl.BlockSpec((nb, c, tile_hw), lambda b, t: (b, 0, t))

    def full_spec(shape):
        # Constant operands; one block covering the whole (tiny) array.
        # TODO(synk): at very large F on v7x these could be single-buffered
        #             (pipeline_mode=pl.Buffered(1)) to save one VMEM copy.
        return pl.BlockSpec(shape, lambda b, t: (0,) * len(shape))

    # Exact-ish VMEM budget: double-buffered I/O blocks + weights + f32
    # intermediates + 25% headroom, capped at 40 MiB (safe on v7x's 64 MiB,
    # still allows 2048-wide lane tiles at large F on v5e/v6e).
    itemsize = jnp.dtype(act_dtype).itemsize
    io_bytes = nb * tile_hw * (F_g + 2 * F_l) * itemsize          # g + x + out blocks
    w_bytes = F_int * (F_g + F_l) * itemsize + (2 * F_int + 1) * 4
    interm_bytes = nb * tile_hw * (F_int + 2) * 4
    est = 2 * io_bytes + 2 * w_bytes + interm_bytes
    vmem_limit = int(min(max(est * 5 // 4, 32 << 20), 40 << 20))

    out_p = pl.pallas_call(
        attention_block_kernel,
        out_shape=jax.ShapeDtypeStruct((N, F_l, HW), act_dtype),
        grid_spec=pltpu.PrefetchScalarGridSpec(
            num_scalar_prefetch=0,
            grid=grid,
            in_specs=[
                pix_spec(F_g),                 # g pixels (channel-major)
                pix_spec(F_l),                 # x pixels (channel-major)
                full_spec((F_int, F_g)),       # W_g   (BN-folded, activation dtype)
                full_spec((F_int, F_l)),       # W_x   (BN-folded, activation dtype)
                full_spec((F_int, 1)),         # b_g + b_x (BN-folded, f32)
                full_spec((F_int, 1)),         # W_psi (BN-folded, f32)
                full_spec((1, 1)),             # b_psi (BN-folded, f32)
            ],
            out_specs=pix_spec(F_l),
        ),
        compiler_params=pltpu.CompilerParams(
            dimension_semantics=("parallel", "parallel"),
            vmem_limit_bytes=vmem_limit),
    )(g_p, x_p, wg, wx, bgx, wpsi, bpsi)

    return out_p.reshape(N, F_l, H, W)


def fold_bn(w, b, gamma, beta, mean, var, eps=1e-5):
    """Fold inference-mode BatchNorm into a preceding 1x1 conv (per-channel).

    w: (C_out, C_in), b/gamma/beta/mean/var: (C_out,). Returns folded (w, b).
    """
    scale = gamma / jnp.sqrt(var + eps)
    return w * scale[:, None], (b - mean) * scale + beta


def init_params(key, F_g, F_l, F_int, eps=1e-5):
    """Deterministic init; per-channel BN (eval mode) folded into scale/bias."""
    k = jax.random.split(key, 6)
    wg = jax.random.normal(k[0], (F_int, F_g), jnp.float32) * 0.2
    bg = jax.random.normal(k[1], (F_int,), jnp.float32) * 0.1
    wx = jax.random.normal(k[2], (F_int, F_l), jnp.float32) * 0.2
    bx = jax.random.normal(k[3], (F_int,), jnp.float32) * 0.1
    wpsi = jax.random.normal(k[4], (1, F_int), jnp.float32) * 0.2
    bpsi = jax.random.normal(k[5], (1,), jnp.float32) * 0.1

    # Fresh BN stats (eval mode): mean=0, var=1, gamma=1, beta=0 — folded with
    # the per-channel helper so real running stats would also fold correctly.
    ones_i, zeros_i = jnp.ones((F_int,)), jnp.zeros((F_int,))
    ones_1, zeros_1 = jnp.ones((1,)), jnp.zeros((1,))
    wg, bg = fold_bn(wg, bg, ones_i, zeros_i, zeros_i, ones_i, eps)
    wx, bx = fold_bn(wx, bx, ones_i, zeros_i, zeros_i, ones_i, eps)
    wpsi, bpsi = fold_bn(wpsi, bpsi, ones_1, zeros_1, zeros_1, ones_1, eps)
    return dict(wg=wg, bg=bg, wx=wx, bx=bx, wpsi=wpsi[0], bpsi=bpsi)


def reference(g, x, p):
    # Pure-JAX reference on NCHW (uses the same BN-folded params).
    g1 = jnp.einsum("of,nfhw->nohw", p["wg"], g) + p["bg"].reshape(1, -1, 1, 1)
    x1 = jnp.einsum("of,nfhw->nohw", p["wx"], x) + p["bx"].reshape(1, -1, 1, 1)
    h = jnp.maximum(g1 + x1, 0.0)
    psi = jax.nn.sigmoid(
        jnp.einsum("f,nfhw->nhw", p["wpsi"], h)[:, None]
        + p["bpsi"].reshape(1, 1, 1, 1))
    return x * psi


if __name__ == "__main__":
    F_g, F_l, F_int = 4, 4, 8
    N, H, W = 2, 16, 16

    key = jax.random.PRNGKey(0)
    kg, kx, kp = jax.random.split(key, 3)
    g = jax.random.normal(kg, (N, F_g, H, W), jnp.float32)
    x = jax.random.normal(kx, (N, F_l, H, W), jnp.float32)
    params = init_params(kp, F_g, F_l, F_int)

    out = attention_block(g, x, params)
    out = jax.block_until_ready(out)

    ref = reference(g, x, params)
    assert out.shape == (N, F_l, H, W)
    assert jnp.allclose(out, ref, atol=1e-5, rtol=1e-5)

    print("KERNEL_OK")
</pallas_src>

<mosaic_0001>
module attributes {stable_mosaic.version = 11 : i64} {
  func.func @attention_block_kernel(%arg0: i32, %arg1: i32, %arg2: memref<2x4x256xf32, #tpu.memory_space<vmem>>, %arg3: memref<2x4x256xf32, #tpu.memory_space<vmem>>, %arg4: memref<8x4xf32, #tpu.memory_space<vmem>>, %arg5: memref<8x4xf32, #tpu.memory_space<vmem>>, %arg6: memref<8x1xf32, #tpu.memory_space<vmem>>, %arg7: memref<8x1xf32, #tpu.memory_space<vmem>>, %arg8: memref<1x1xf32, #tpu.memory_space<vmem>>, %arg9: memref<2x4x256xf32, #tpu.memory_space<vmem>>) attributes {dimension_semantics = [#tpu.dimension_semantics<parallel>, #tpu.dimension_semantics<parallel>], iteration_bounds = array<i64: 1, 1>, scalar_prefetch = 0 : i64, scratch_operands = 0 : i64, tpu.core_type = #tpu.core_type<tc>, window_params = [{transform_indices = @transform_0, window_bounds = array<i64: 2, 4, 256>}, {transform_indices = @transform_1, window_bounds = array<i64: 2, 4, 256>}, {pipeline_mode = #tpu.pipeline_mode<synchronous>, transform_indices = @transform_2, window_bounds = array<i64: 8, 4>}, {pipeline_mode = #tpu.pipeline_mode<synchronous>, transform_indices = @transform_3, window_bounds = array<i64: 8, 4>}, {pipeline_mode = #tpu.pipeline_mode<synchronous>, transform_indices = @transform_4, window_bounds = array<i64: 8, 1>}, {pipeline_mode = #tpu.pipeline_mode<synchronous>, transform_indices = @transform_5, window_bounds = array<i64: 8, 1>}, {pipeline_mode = #tpu.pipeline_mode<synchronous>, transform_indices = @transform_6, window_bounds = array<i64: 1, 1>}, {transform_indices = @transform_7, window_bounds = array<i64: 2, 4, 256>}]} {
    %c0 = arith.constant 0 : index
    %c0_0 = arith.constant 0 : index
    %0 = vector.load %arg4[%c0, %c0_0] : memref<8x4xf32, #tpu.memory_space<vmem>>, vector<8x4xf32>
    %c0_1 = arith.constant 0 : index
    %c0_2 = arith.constant 0 : index
    %1 = vector.load %arg5[%c0_1, %c0_2] : memref<8x4xf32, #tpu.memory_space<vmem>>, vector<8x4xf32>
    %c0_3 = arith.constant 0 : index
    %c0_4 = arith.constant 0 : index
    %2 = vector.load %arg6[%c0_3, %c0_4] : memref<8x1xf32, #tpu.memory_space<vmem>>, vector<8x1xf32>
    %c0_5 = arith.constant 0 : index
    %c0_6 = arith.constant 0 : index
    %3 = vector.load %arg7[%c0_5, %c0_6] : memref<8x1xf32, #tpu.memory_space<vmem>>, vector<8x1xf32>
    %c0_7 = arith.constant 0 : index
    %c0_8 = arith.constant 0 : index
    %4 = vector.load %arg8[%c0_7, %c0_8] : memref<1x1xf32, #tpu.memory_space<vmem>>, vector<1x1xf32>
    %c0_9 = arith.constant 0 : index
    %c0_10 = arith.constant 0 : index
    %c0_11 = arith.constant 0 : index
    %5 = vector.load %arg3[%c0_9, %c0_10, %c0_11] : memref<2x4x256xf32, #tpu.memory_space<vmem>>, vector<1x4x256xf32>
    %6 = vector.shape_cast %5 : vector<1x4x256xf32> to vector<4x256xf32>
    %c0_12 = arith.constant 0 : index
    %c0_13 = arith.constant 0 : index
    %c0_14 = arith.constant 0 : index
    %7 = vector.load %arg2[%c0_12, %c0_13, %c0_14] : memref<2x4x256xf32, #tpu.memory_space<vmem>>, vector<1x4x256xf32>
    %8 = vector.shape_cast %7 : vector<1x4x256xf32> to vector<4x256xf32>
    %cst = arith.constant dense<0.000000e+00> : vector<8x256xf32>
    %9 = tpu.matmul %0, %8, %cst {dimension_numbers = #tpu.dot_dimension_numbers<[1], [0], [0], [1], [0, 0, 1, 1], [], []>} : vector<8x4xf32>, vector<4x256xf32>, vector<8x256xf32> -> vector<8x256xf32>
    %cst_15 = arith.constant dense<0.000000e+00> : vector<8x256xf32>
    %10 = tpu.matmul %1, %6, %cst_15 {dimension_numbers = #tpu.dot_dimension_numbers<[1], [0], [0], [1], [0, 0, 1, 1], [], []>} : vector<8x4xf32>, vector<4x256xf32>, vector<8x256xf32> -> vector<8x256xf32>
    %11 = arith.addf %9, %10 : vector<8x256xf32>
    %12 = vector.broadcast %2 : vector<8x1xf32> to vector<8x256xf32>
    %13 = arith.addf %11, %12 : vector<8x256xf32>
    %cst_16 = arith.constant 0.000000e+00 : f32
    %14 = vector.broadcast %cst_16 : f32 to vector<8x256xf32>
    %15 = arith.maximumf %13, %14 : vector<8x256xf32>
    %16 = vector.broadcast %3 : vector<8x1xf32> to vector<8x256xf32>
    %17 = arith.mulf %15, %16 : vector<8x256xf32>
    %cst_17 = arith.constant dense<0.000000e+00> : vector<256xf32>
    %18 = vector.multi_reduction <add>, %17, %cst_17 [0] : vector<8x256xf32> to vector<256xf32>
    %19 = vector.shape_cast %18 : vector<256xf32> to vector<1x256xf32>
    %20 = vector.broadcast %4 : vector<1x1xf32> to vector<1x256xf32>
    %21 = arith.addf %19, %20 : vector<1x256xf32>
    %22 = arith.negf %21 : vector<1x256xf32>
    %23 = math.exp %22 : vector<1x256xf32>
    %cst_18 = arith.constant 1.000000e+00 : f32
    %24 = vector.broadcast %cst_18 : f32 to vector<1x256xf32>
    %25 = arith.addf %24, %23 : vector<1x256xf32>
    %26 = arith.divf %24, %25 : vector<1x256xf32>
    %27 = vector.broadcast %26 : vector<1x256xf32> to vector<4x256xf32>
    %28 = arith.mulf %6, %27 : vector<4x256xf32>
    %c0_19 = arith.constant 0 : index
    %c0_20 = arith.constant 0 : index
    %c0_21 = arith.constant 0 : index
    %29 = vector.load %arg9[%c0_19, %c0_20, %c0_21] : memref<2x4x256xf32, #tpu.memory_space<vmem>>, vector<1x4x256xf32>
    %30 = vector.shape_cast %29 : vector<1x4x256xf32> to vector<4x256xf32>
    %31 = vector.shape_cast %28 : vector<4x256xf32> to vector<1x4x256xf32>
    tpu.vector_store %arg9[%c0_19, %c0_20, %c0_21], %31 {strides = array<i32>} : memref<2x4x256xf32, #tpu.memory_space<vmem>>, vector<1x4x256xf32>,
    %c1 = arith.constant 1 : index
    %c0_22 = arith.constant 0 : index
    %c0_23 = arith.constant 0 : index
    %32 = vector.load %arg3[%c1, %c0_22, %c0_23] : memref<2x4x256xf32, #tpu.memory_space<vmem>>, vector<1x4x256xf32>
    %33 = vector.shape_cast %32 : vector<1x4x256xf32> to vector<4x256xf32>
    %c1_24 = arith.constant 1 : index
    %c0_25 = arith.constant 0 : index
    %c0_26 = arith.constant 0 : index
    %34 = vector.load %arg2[%c1_24, %c0_25, %c0_26] : memref<2x4x256xf32, #tpu.memory_space<vmem>>, vector<1x4x256xf32>
    %35 = vector.shape_cast %34 : vector<1x4x256xf32> to vector<4x256xf32>
    %cst_27 = arith.constant dense<0.000000e+00> : vector<8x256xf32>
    %36 = tpu.matmul %0, %35, %cst_27 {dimension_numbers = #tpu.dot_dimension_numbers<[1], [0], [0], [1], [0, 0, 1, 1], [], []>} : vector<8x4xf32>, vector<4x256xf32>, vector<8x256xf32> -> vector<8x256xf32>
    %cst_28 = arith.constant dense<0.000000e+00> : vector<8x256xf32>
    %37 = tpu.matmul %1, %33, %cst_28 {dimension_numbers = #tpu.dot_dimension_numbers<[1], [0], [0], [1], [0, 0, 1, 1], [], []>} : vector<8x4xf32>, vector<4x256xf32>, vector<8x256xf32> -> vector<8x256xf32>
    %38 = arith.addf %36, %37 : vector<8x256xf32>
    %39 = vector.broadcast %2 : vector<8x1xf32> to vector<8x256xf32>
    %40 = arith.addf %38, %39 : vector<8x256xf32>
    %cst_29 = arith.constant 0.000000e+00 : f32
    %41 = vector.broadcast %cst_29 : f32 to vector<8x256xf32>
    %42 = arith.maximumf %40, %41 : vector<8x256xf32>
    %43 = vector.broadcast %3 : vector<8x1xf32> to vector<8x256xf32>
    %44 = arith.mulf %42, %43 : vector<8x256xf32>
    %cst_30 = arith.constant dense<0.000000e+00> : vector<256xf32>
    %45 = vector.multi_reduction <add>, %44, %cst_30 [0] : vector<8x256xf32> to vector<256xf32>
    %46 = vector.shape_cast %45 : vector<256xf32> to vector<1x256xf32>
    %47 = vector.broadcast %4 : vector<1x1xf32> to vector<1x256xf32>
    %48 = arith.addf %46, %47 : vector<1x256xf32>
    %49 = arith.negf %48 : vector<1x256xf32>
    %50 = math.exp %49 : vector<1x256xf32>
    %cst_31 = arith.constant 1.000000e+00 : f32
    %51 = vector.broadcast %cst_31 : f32 to vector<1x256xf32>
    %52 = arith.addf %51, %50 : vector<1x256xf32>
    %53 = arith.divf %51, %52 : vector<1x256xf32>
    %54 = vector.broadcast %53 : vector<1x256xf32> to vector<4x256xf32>
    %55 = arith.mulf %33, %54 : vector<4x256xf32>
    %c1_32 = arith.constant 1 : index
    %c0_33 = arith.constant 0 : index
    %c0_34 = arith.constant 0 : index
    %56 = vector.load %arg9[%c1_32, %c0_33, %c0_34] : memref<2x4x256xf32, #tpu.memory_space<vmem>>, vector<1x4x256xf32>
    %57 = vector.shape_cast %56 : vector<1x4x256xf32> to vector<4x256xf32>
    %58 = vector.shape_cast %55 : vector<4x256xf32> to vector<1x4x256xf32>
    tpu.vector_store %arg9[%c1_32, %c0_33, %c0_34], %58 {strides = array<i32>} : memref<2x4x256xf32, #tpu.memory_space<vmem>>, vector<1x4x256xf32>,
    return
  }
  func.func @transform_0(%arg0: i32, %arg1: i32) -> (i32, i32, i32) {
    %c0_i32 = arith.constant 0 : i32
    %c0_i32_0 = arith.constant 0 : i32
    return %arg0, %c0_i32, %arg1 : i32, i32, i32
  }
  func.func @transform_1(%arg0: i32, %arg1: i32) -> (i32, i32, i32) {
    %c0_i32 = arith.constant 0 : i32
    %c0_i32_0 = arith.constant 0 : i32
    return %arg0, %c0_i32, %arg1 : i32, i32, i32
  }
  func.func @transform_2(%arg0: i32, %arg1: i32) -> (i32, i32) {
    %c0_i32 = arith.constant 0 : i32
    %c0_i32_0 = arith.constant 0 : i32
    %c0_i32_1 = arith.constant 0 : i32
    return %c0_i32, %c0_i32_0 : i32, i32
  }
  func.func @transform_3(%arg0: i32, %arg1: i32) -> (i32, i32) {
    %c0_i32 = arith.constant 0 : i32
    %c0_i32_0 = arith.constant 0 : i32
    %c0_i32_1 = arith.constant 0 : i32
    return %c0_i32, %c0_i32_0 : i32, i32
  }
  func.func @transform_4(%arg0: i32, %arg1: i32) -> (i32, i32) {
    %c0_i32 = arith.constant 0 : i32
    %c0_i32_0 = arith.constant 0 : i32
    %c0_i32_1 = arith.constant 0 : i32
    return %c0_i32, %c0_i32_0 : i32, i32
  }
  func.func @transform_5(%arg0: i32, %arg1: i32) -> (i32, i32) {
    %c0_i32 = arith.constant 0 : i32
    %c0_i32_0 = arith.constant 0 : i32
    %c0_i32_1 = arith.constant 0 : i32
    return %c0_i32, %c0_i32_0 : i32, i32
  }
  func.func @transform_6(%arg0: i32, %arg1: i32) -> (i32, i32) {
    %c0_i32 = arith.constant 0 : i32
    %c0_i32_0 = arith.constant 0 : i32
    %c0_i32_1 = arith.constant 0 : i32
    return %c0_i32, %c0_i32_0 : i32, i32
  }
  func.func @transform_7(%arg0: i32, %arg1: i32) -> (i32, i32, i32) {
    %c0_i32 = arith.constant 0 : i32
    %c0_i32_0 = arith.constant 0 : i32
    return %arg0, %c0_i32, %arg1 : i32, i32, i32
  }
}

</mosaic_0001>

<llo_original>
// kernel: tpu_custom_call.1
$region0: #{tpu_custom_call.1}
  #allocation0 [shape = 'u32[]', space=smem, size = 0x4, offset = 0x4, fixed_abs, tag = 'smem constant byte address 0x4 - core index']
  #allocation1 [shape = 'u32[144,128]{1,0:T(1,128)}', space=vmem, size = 0x12000, scoped, tag = 'internal scratch']
  #allocation2 [shape = 'f32[1,1]{1,0:T(1,128)S(1)}', space=vmem, size = 0x200, scoped, tag = 'scoped memory for tpu_custom_call.1']
  %s0 = inlined_call_operand.vmem [shape: f32[2,4,256], index: 0, kind: input, shape index: {}]
  %s1 = inlined_call_operand.vmem [shape: f32[2,4,256], index: 1, kind: input, shape index: {}]
  %s2 = inlined_call_operand.vmem [shape: f32[8,4], index: 2, kind: input, shape index: {}]
  %s3 = inlined_call_operand.vmem [shape: f32[8,4], index: 3, kind: input, shape index: {}]
  %s4 = inlined_call_operand.vmem [shape: f32[8,1], index: 4, kind: input, shape index: {}]
  %s5 = inlined_call_operand.vmem [shape: f32[8,1], index: 5, kind: input, shape index: {}]
  %s6 = inlined_call_operand.<no memory space> [shape: f32[1,1], index: 6, kind: input, shape index: {}]
  %s7 = inlined_call_operand.hbm [shape: f32[2,4,256], index: 7, kind: output, shape index: {}]
  %s8 = sld [smem:[#allocation0]]
  $region38: #{tpu_custom_call.1} parent=0
    _
  %s10 = ssub.s32 1, %s8
  %s11 = scalar_select 0, %s10, %s8
  %v12 = vstv %s6
  %13 = vst [vmem:[#allocation2] sm:$0x1] %v12
  $region1: #{tpu_custom_call.1} parent=0
    #allocation3 [shape = 'u8[8192]{0}', space=vmem, size = 0x2000, scoped, tag = 'output window, operand 0, single buffered']
    #allocation4 [shape = 's32[1]{0}', space=sflag, size = 0x4, scoped, tag = 'scoped memory for tpu_custom_call.1']
    %14 = vsyncpa [#allocation4], 0
    // Predicated region
    $region2: #{tpu_custom_call.1} parent=1 // pred_check
      _
    $region3: #{tpu_custom_call.1} parent=1 // pred_check_branch
      %16 = sbr.rel (0) target = $region5
    $region4: #{tpu_custom_call.1} parent=1 // pred_region
      _
    $region5: #{tpu_custom_call.1} parent=1 // pred_fallthru
      _
    // Predicated region
    $region6: #{tpu_custom_call.1} parent=1 // pred_check
      _
    $region7: #{tpu_custom_call.1} parent=1 // pred_check_branch
      %18 = sbr.rel (0) target = $region9
    $region8: #{tpu_custom_call.1} parent=1 // pred_region
      _
    $region9: #{tpu_custom_call.1} parent=1 // pred_fallthru
      _
    // Predicated region
    $region10: #{tpu_custom_call.1} parent=1 // pred_check
      _
    $region11: #{tpu_custom_call.1} parent=1 // pred_check_branch
      %20 = sbr.rel (0) target = $region13
    $region12: #{tpu_custom_call.1} parent=1 // pred_region
      _
    $region13: #{tpu_custom_call.1} parent=1 // pred_fallthru
      _
    // Predicated region
    $region14: #{tpu_custom_call.1} parent=1 // pred_check
      _
    $region15: #{tpu_custom_call.1} parent=1 // pred_check_branch
      %22 = sbr.rel (0) target = $region17
    $region16: #{tpu_custom_call.1} parent=1 // pred_region
      _
    $region17: #{tpu_custom_call.1} parent=1 // pred_fallthru
      _
    // Predicated region
    $region18: #{tpu_custom_call.1} parent=1 // pred_check
      _
    $region19: #{tpu_custom_call.1} parent=1 // pred_check_branch
      %24 = sbr.rel (0) target = $region21
    $region20: #{tpu_custom_call.1} parent=1 // pred_region
      _
    $region21: #{tpu_custom_call.1} parent=1 // pred_fallthru
      _
    // Predicated region
    $region22: #{tpu_custom_call.1} parent=1 // pred_check
      _
    $region23: #{tpu_custom_call.1} parent=1 // pred_check_branch
      %26 = sbr.rel (0) target = $region25
    $region24: #{tpu_custom_call.1} parent=1 // pred_region
      _
    $region25: #{tpu_custom_call.1} parent=1 // pred_fallthru
      _
    // Predicated region
    $region26: #{tpu_custom_call.1} parent=1 // pred_check
      _
    $region27: #{tpu_custom_call.1} parent=1 // pred_check_branch
      %28 = sbr.rel (0) target = $region29
    $region28: #{tpu_custom_call.1} parent=1 // pred_region
      _
    $region29: #{tpu_custom_call.1} parent=1 // pred_fallthru
      _
    %v29 = vld [vmem:[%s2] sm:$0xff]
    %v30 = vld [vmem:[%s3] sm:$0xff]
    %v31 = vld [vmem:[%s4] sm:$0xff]
    %v32 = vld [vmem:[%s5] sm:$0xff]
    %v33 = vld [vmem:[#allocation2] sm:$0x1]
    %v34 = vld [vmem:[%s1] sm:$0xff]
    %v35 = vld [vmem:[%s0] sm:$0xff]
    %v37 = vcombine.high %v34, %v34
    %vm38 = vcmask 31744
    %v40 = vsel %vm38, %v30, 0
    %vm42 = vcmask 1043456
    %v43 = vsel %vm42, %v34, 0
    %v45 = vsel %vm42, %v37, 0
    %47 = vmatprep.subr.mxu0 0.0
    %48 = vmatpush1.msra.mxu0 0.0
    %49 = vmatprep.subr.mxu0 0.0
    %50 = vmatpush1.msra.mxu0 0.0
    %51 = vmatprep.subr.mxu0 0.0
    %52 = vmatpush1.msra.mxu0 0.0
    %53 = vmatprep.subr.mxu0 0.0
    %54 = vmatpush1.msra.mxu0 0.0
    %55 = vmatprep.subr.mxu0 0.0
    %56 = vmatpush1.msra.mxu0 0.0
    %57 = vmatprep.subr.mxu0 0.0
    %58 = vmatpush1.msra.mxu0 0.0
    %59 = vmatprep.subr.mxu0 0.0
    %60 = vmatpush1.msra.mxu0 0.0
    %61 = vmatprep.subr.mxu0 0.0
    %62 = vmatpush1.msra.mxu0 0.0
    %63 = vmatprep.subr.mxu0 0.0
    %64 = vmatpush1.msra.mxu0 0.0
    %65 = vmatprep.subr.mxu0 0.0
    %66 = vmatpush1.msra.mxu0 0.0
    %67 = vmatprep.subr.mxu0 0.0
    %68 = vmatpush1.msra.mxu0 0.0
    %69 = vmatprep.subr.mxu0 0.0
    %70 = vmatpush1.msra.mxu0 0.0
    %71 = vmatprep.subr.mxu0 0.0
    %72 = vmatpush1.msra.mxu0 0.0
    %73 = vmatprep.subr.mxu0 0.0
    %74 = vmatpush1.msra.mxu0 0.0
    %75 = vmatprep.subr.mxu0 0.0
    %76 = vmatpush1.msra.mxu0 0.0
    %77 = vmatprep.subr.mxu0 %v45
    %78 = vmatpush1.msra.mxu0 %v43
    %79 = vmatprep.subr.mxu0 0.0
    %80 = vmatpush2.msra.mxu0 0.0
    %81 = vmatprep.subr.mxu0 0.0
    %82 = vmatpush2.msra.mxu0 0.0
    %83 = vmatprep.subr.mxu0 0.0
    %84 = vmatpush2.msra.mxu0 0.0
    %85 = vmatprep.subr.mxu0 0.0
    %86 = vmatpush2.msra.mxu0 0.0
    %87 = vmatprep.subr.mxu0 0.0
    %88 = vmatpush2.msra.mxu0 0.0
    %89 = vmatprep.subr.mxu0 0.0
    %90 = vmatpush2.msra.mxu0 0.0
    %91 = vmatprep.subr.mxu0 0.0
    %92 = vmatpush2.msra.mxu0 0.0
    %93 = vmatprep.subr.mxu0 0.0
    %94 = vmatpush2.msra.mxu0 0.0
    %95 = vmatprep.subr.mxu0 0.0
    %96 = vmatpush2.msra.mxu0 0.0
    %97 = vmatprep.subr.mxu0 0.0
    %98 = vmatpush2.msra.mxu0 0.0
    %99 = vmatprep.subr.mxu0 0.0
    %100 = vmatpush2.msra.mxu0 0.0
    %101 = vmatprep.subr.mxu0 0.0
    %102 = vmatpush2.msra.mxu0 0.0
    %103 = vmatprep.subr.mxu0 0.0
    %104 = vmatpush2.msra.mxu0 0.0
    %105 = vmatprep.subr.mxu0 0.0
    %106 = vmatpush2.msra.mxu0 0.0
    %107 = vmatprep.subr.mxu0 0.0
    %108 = vmatpush2.msra.mxu0 0.0
    %109 = vmatprep.subr.mxu0 0.0
    %110 = vmatpush2.msra.mxu0 0.0
    %111 = vmatprep.mubr.f32.mxu0 0.0
    %112 = vmatmul.mubr.f32.gmra.mxu0 %v40
    %v113 = vpop.f32.mrf.mxu0
    %v114 = vadd.f32 0.0, %v113
    %v115 = vpop.f32.mrf.mxu0
    %v116 = vadd.f32 0.0, %v115
    %117 = vdwg.mxu0
    %v119 = vcombine.high %v35, %v35
    %v121 = vsel %vm38, %v29, 0
    %v123 = vsel %vm42, %v35, 0
    %v125 = vsel %vm42, %v119, 0
    %127 = vmatprep.subr.mxu0 0.0
    %128 = vmatpush1.msra.mxu0 0.0
    %129 = vmatprep.subr.mxu0 0.0
    %130 = vmatpush1.msra.mxu0 0.0
    %131 = vmatprep.subr.mxu0 0.0
    %132 = vmatpush1.msra.mxu0 0.0
    %133 = vmatprep.subr.mxu0 0.0
    %134 = vmatpush1.msra.mxu0 0.0
    %135 = vmatprep.subr.mxu0 0.0
    %136 = vmatpush1.msra.mxu0 0.0
    %137 = vmatprep.subr.mxu0 0.0
    %138 = vmatpush1.msra.mxu0 0.0
    %139 = vmatprep.subr.mxu0 0.0
    %140 = vmatpush1.msra.mxu0 0.0
    %141 = vmatprep.subr.mxu0 0.0
    %142 = vmatpush1.msra.mxu0 0.0
    %143 = vmatprep.subr.mxu0 0.0
    %144 = vmatpush1.msra.mxu0 0.0
    %145 = vmatprep.subr.mxu0 0.0
    %146 = vmatpush1.msra.mxu0 0.0
    %147 = vmatprep.subr.mxu0 0.0
    %148 = vmatpush1.msra.mxu0 0.0
    %149 = vmatprep.subr.mxu0 0.0
    %150 = vmatpush1.msra.mxu0 0.0
    %151 = vmatprep.subr.mxu0 0.0
    %152 = vmatpush1.msra.mxu0 0.0
    %153 = vmatprep.subr.mxu0 0.0
    %154 = vmatpush1.msra.mxu0 0.0
    %155 = vmatprep.subr.mxu0 0.0
    %156 = vmatpush1.msra.mxu0 0.0
    %157 = vmatprep.subr.mxu0 %v125
    %158 = vmatpush1.msra.mxu0 %v123
    %159 = vmatprep.subr.mxu0 0.0
    %160 = vmatpush2.msra.mxu0 0.0
    %161 = vmatprep.subr.mxu0 0.0
    %162 = vmatpush2.msra.mxu0 0.0
    %163 = vmatprep.subr.mxu0 0.0
    %164 = vmatpush2.msra.mxu0 0.0
    %165 = vmatprep.subr.mxu0 0.0
    %166 = vmatpush2.msra.mxu0 0.0
    %167 = vmatprep.subr.mxu0 0.0
    %168 = vmatpush2.msra.mxu0 0.0
    %169 = vmatprep.subr.mxu0 0.0
    %170 = vmatpush2.msra.mxu0 0.0
    %171 = vmatprep.subr.mxu0 0.0
    %172 = vmatpush2.msra.mxu0 0.0
    %173 = vmatprep.subr.mxu0 0.0
    %174 = vmatpush2.msra.mxu0 0.0
    %175 = vmatprep.subr.mxu0 0.0
    %176 = vmatpush2.msra.mxu0 0.0
    %177 = vmatprep.subr.mxu0 0.0
    %178 = vmatpush2.msra.mxu0 0.0
    %179 = vmatprep.subr.mxu0 0.0
    %180 = vmatpush2.msra.mxu0 0.0
    %181 = vmatprep.subr.mxu0 0.0
    %182 = vmatpush2.msra.mxu0 0.0
    %183 = vmatprep.subr.mxu0 0.0
    %184 = vmatpush2.msra.mxu0 0.0
    %185 = vmatprep.subr.mxu0 0.0
    %186 = vmatpush2.msra.mxu0 0.0
    %187 = vmatprep.subr.mxu0 0.0
    %188 = vmatpush2.msra.mxu0 0.0
    %189 = vmatprep.subr.mxu0 0.0
    %190 = vmatpush2.msra.mxu0 0.0
    %191 = vmatprep.mubr.f32.mxu0 0.0
    %192 = vmatmul.mubr.f32.gmra.mxu0 %v121
    %v193 = vpop.f32.mrf.mxu0
    %v194 = vadd.f32 %v114, %v193
    %v195 = vpop.f32.mrf.mxu0
    %v196 = vadd.f32 %v116, %v195
    %197 = vdwg.mxu0
    %199 = vset.pattern.permute.xlu0 0
    %200 = vperm.xlu0 %199, %v31
    %v201 = vpop.permute.xlu0 %200
    %v203 = vadd.f32 %v194, %v201
    %v204 = vadd.f32 %v196, %v201
    %v205 = vmax.f32 %v203, 0.0
    %v206 = vmax.f32 %v204, 0.0
    %208 = vset.pattern.permute.xlu0 0
    %209 = vperm.xlu0 %208, %v32
    %v210 = vpop.permute.xlu0 %209
    %v212 = vmul.f32 %v205, %v210
    %v213 = vmul.f32 %v206, %v210
    %v214 = vrot.slane %v212, 4
    %v215 = vadd.f32 %v212, %v214
    %v216 = vrot.slane %v215, 2
    %v217 = vadd.f32 %v215, %v216
    %v218 = vrot.slane %v217, 1
    %v219 = vadd.f32 %v217, %v218
    %v220 = vrot.slane %v213, 4
    %v221 = vadd.f32 %v213, %v220
    %v222 = vrot.slane %v221, 2
    %v223 = vadd.f32 %v221, %v222
    %v224 = vrot.slane %v223, 1
    %v225 = vadd.f32 %v223, %v224
    %227 = vset.pattern.permute.xlu0 0
    %228 = vperm.xlu0 %227, %v33
    %v229 = vpop.permute.xlu0 %228
    %v231 = vlaneseq
    %v232 = vshrl.u32 %v231, 7
    %v233 = vsub.s32 0, %v232
    %v234 = vrot.slane %v229, %v233
    %v235 = vadd.f32 %v219, %v234
    %v236 = vadd.f32 %v225, %v234
    %v237 = vxor.u32 %v235, 2147483648
    %v238 = vxor.u32 %v236, 2147483648
    %v239 = vmul.f32 %v237, 1.442695
    %v240 = vpow.pop %v239
    %v241 = vmul.f32 %v238, 1.442695
    %v242 = vpow.pop %v241
    %v243 = vadd.f32 %v240, 1.0
    %v244 = vadd.f32 %v242, 1.0
    %v245 = vrcp.pop %v243
    %v246 = vmul.f32 1.0, %v245
    %v247 = vrcp.pop %v244
    %v248 = vmul.f32 1.0, %v247
    %v251 = vcombine.low %v246, %v248
    %v253 = vmul.f32 %v34, %v251
    %254 = vst [vmem:[#allocation3] sm:$0xff] %v253
    %s255 = scalar_lea.vmem %s1, 8
    %v256 = vld [vmem:[%s255] sm:$0xff]
    %s257 = scalar_lea.vmem %s0, 8
    %v258 = vld [vmem:[%s257] sm:$0xff]
    %v260 = vcombine.high %v256, %v256
    %v261 = vsel %vm42, %v256, 0
    %v263 = vsel %vm42, %v260, 0
    %265 = vmatprep.subr.mxu0 0.0
    %266 = vmatpush1.msra.mxu0 0.0
    %267 = vmatprep.subr.mxu0 0.0
    %268 = vmatpush1.msra.mxu0 0.0
    %269 = vmatprep.subr.mxu0 0.0
    %270 = vmatpush1.msra.mxu0 0.0
    %271 = vmatprep.subr.mxu0 0.0
    %272 = vmatpush1.msra.mxu0 0.0
    %273 = vmatprep.subr.mxu0 0.0
    %274 = vmatpush1.msra.mxu0 0.0
    %275 = vmatprep.subr.mxu0 0.0
    %276 = vmatpush1.msra.mxu0 0.0
    %277 = vmatprep.subr.mxu0 0.0
    %278 = vmatpush1.msra.mxu0 0.0
    %279 = vmatprep.subr.mxu0 0.0
    %280 = vmatpush1.msra.mxu0 0.0
    %281 = vmatprep.subr.mxu0 0.0
    %282 = vmatpush1.msra.mxu0 0.0
    %283 = vmatprep.subr.mxu0 0.0
    %284 = vmatpush1.msra.mxu0 0.0
    %285 = vmatprep.subr.mxu0 0.0
    %286 = vmatpush1.msra.mxu0 0.0
    %287 = vmatprep.subr.mxu0 0.0
    %288 = vmatpush1.msra.mxu0 0.0
    %289 = vmatprep.subr.mxu0 0.0
    %290 = vmatpush1.msra.mxu0 0.0
    %291 = vmatprep.subr.mxu0 0.0
    %292 = vmatpush1.msra.mxu0 0.0
    %293 = vmatprep.subr.mxu0 0.0
    %294 = vmatpush1.msra.mxu0 0.0
    %295 = vmatprep.subr.mxu0 %v263
    %296 = vmatpush1.msra.mxu0 %v261
    %297 = vmatprep.subr.mxu0 0.0
    %298 = vmatpush2.msra.mxu0 0.0
    %299 = vmatprep.subr.mxu0 0.0
    %300 = vmatpush2.msra.mxu0 0.0
    %301 = vmatprep.subr.mxu0 0.0
    %302 = vmatpush2.msra.mxu0 0.0
    %303 = vmatprep.subr.mxu0 0.0
    %304 = vmatpush2.msra.mxu0 0.0
    %305 = vmatprep.subr.mxu0 0.0
    %306 = vmatpush2.msra.mxu0 0.0
    %307 = vmatprep.subr.mxu0 0.0
    %308 = vmatpush2.msra.mxu0 0.0
    %309 = vmatprep.subr.mxu0 0.0
    %310 = vmatpush2.msra.mxu0 0.0
    %311 = vmatprep.subr.mxu0 0.0
    %312 = vmatpush2.msra.mxu0 0.0
    %313 = vmatprep.subr.mxu0 0.0
    %314 = vmatpush2.msra.mxu0 0.0
    %315 = vmatprep.subr.mxu0 0.0
    %316 = vmatpush2.msra.mxu0 0.0
    %317 = vmatprep.subr.mxu0 0.0
    %318 = vmatpush2.msra.mxu0 0.0
    %319 = vmatprep.subr.mxu0 0.0
    %320 = vmatpush2.msra.mxu0 0.0
    %321 = vmatprep.subr.mxu0 0.0
    %322 = vmatpush2.msra.mxu0 0.0
    %323 = vmatprep.subr.mxu0 0.0
    %324 = vmatpush2.msra.mxu0 0.0
    %325 = vmatprep.subr.mxu0 0.0
    %326 = vmatpush2.msra.mxu0 0.0
    %327 = vmatprep.subr.mxu0 0.0
    %328 = vmatpush2.msra.mxu0 0.0
    %329 = vmatprep.mubr.f32.mxu0 0.0
    %330 = vmatmul.mubr.f32.gmra.mxu0 %v40
    %v331 = vpop.f32.mrf.mxu0
    %v332 = vadd.f32 0.0, %v331
    %v333 = vpop.f32.mrf.mxu0
    %v334 = vadd.f32 0.0, %v333
    %335 = vdwg.mxu0
    %v337 = vcombine.high %v258, %v258
    %v338 = vsel %vm42, %v258, 0
    %v340 = vsel %vm42, %v337, 0
    %342 = vmatprep.subr.mxu0 0.0
    %343 = vmatpush1.msra.mxu0 0.0
    %344 = vmatprep.subr.mxu0 0.0
    %345 = vmatpush1.msra.mxu0 0.0
    %346 = vmatprep.subr.mxu0 0.0
    %347 = vmatpush1.msra.mxu0 0.0
    %348 = vmatprep.subr.mxu0 0.0
    %349 = vmatpush1.msra.mxu0 0.0
    %350 = vmatprep.subr.mxu0 0.0
    %351 = vmatpush1.msra.mxu0 0.0
    %352 = vmatprep.subr.mxu0 0.0
    %353 = vmatpush1.msra.mxu0 0.0
    %354 = vmatprep.subr.mxu0 0.0
    %355 = vmatpush1.msra.mxu0 0.0
    %356 = vmatprep.subr.mxu0 0.0
    %357 = vmatpush1.msra.mxu0 0.0
    %358 = vmatprep.subr.mxu0 0.0
    %359 = vmatpush1.msra.mxu0 0.0
    %360 = vmatprep.subr.mxu0 0.0
    %361 = vmatpush1.msra.mxu0 0.0
    %362 = vmatprep.subr.mxu0 0.0
    %363 = vmatpush1.msra.mxu0 0.0
    %364 = vmatprep.subr.mxu0 0.0
    %365 = vmatpush1.msra.mxu0 0.0
    %366 = vmatprep.subr.mxu0 0.0
    %367 = vmatpush1.msra.mxu0 0.0
    %368 = vmatprep.subr.mxu0 0.0
    %369 = vmatpush1.msra.mxu0 0.0
    %370 = vmatprep.subr.mxu0 0.0
    %371 = vmatpush1.msra.mxu0 0.0
    %372 = vmatprep.subr.mxu0 %v340
    %373 = vmatpush1.msra.mxu0 %v338
    %374 = vmatprep.subr.mxu0 0.0
    %375 = vmatpush2.msra.mxu0 0.0
    %376 = vmatprep.subr.mxu0 0.0
    %377 = vmatpush2.msra.mxu0 0.0
    %378 = vmatprep.subr.mxu0 0.0
    %379 = vmatpush2.msra.mxu0 0.0
    %380 = vmatprep.subr.mxu0 0.0
    %381 = vmatpush2.msra.mxu0 0.0
    %382 = vmatprep.subr.mxu0 0.0
    %383 = vmatpush2.msra.mxu0 0.0
    %384 = vmatprep.subr.mxu0 0.0
    %385 = vmatpush2.msra.mxu0 0.0
    %386 = vmatprep.subr.mxu0 0.0
    %387 = vmatpush2.msra.mxu0 0.0
    %388 = vmatprep.subr.mxu0 0.0
    %389 = vmatpush2.msra.mxu0 0.0
    %390 = vmatprep.subr.mxu0 0.0
    %391 = vmatpush2.msra.mxu0 0.0
    %392 = vmatprep.subr.mxu0 0.0
    %393 = vmatpush2.msra.mxu0 0.0
    %394 = vmatprep.subr.mxu0 0.0
    %395 = vmatpush2.msra.mxu0 0.0
    %396 = vmatprep.subr.mxu0 0.0
    %397 = vmatpush2.msra.mxu0 0.0
    %398 = vmatprep.subr.mxu0 0.0
    %399 = vmatpush2.msra.mxu0 0.0
    %400 = vmatprep.subr.mxu0 0.0
    %401 = vmatpush2.msra.mxu0 0.0
    %402 = vmatprep.subr.mxu0 0.0
    %403 = vmatpush2.msra.mxu0 0.0
    %404 = vmatprep.subr.mxu0 0.0
    %405 = vmatpush2.msra.mxu0 0.0
    %406 = vmatprep.mubr.f32.mxu0 0.0
    %407 = vmatmul.mubr.f32.gmra.mxu0 %v121
    %v408 = vpop.f32.mrf.mxu0
    %v409 = vadd.f32 %v332, %v408
    %v410 = vpop.f32.mrf.mxu0
    %v411 = vadd.f32 %v334, %v410
    %412 = vdwg.mxu0
    %v413 = vadd.f32 %v409, %v201
    %v414 = vadd.f32 %v411, %v201
    %v415 = vmax.f32 %v413, 0.0
    %v416 = vmax.f32 %v414, 0.0
    %v417 = vmul.f32 %v415, %v210
    %v418 = vmul.f32 %v416, %v210
    %v419 = vrot.slane %v417, 4
    %v420 = vadd.f32 %v417, %v419
    %v421 = vrot.slane %v420, 2
    %v422 = vadd.f32 %v420, %v421
    %v423 = vrot.slane %v422, 1
    %v424 = vadd.f32 %v422, %v423
    %v425 = vrot.slane %v418, 4
    %v426 = vadd.f32 %v418, %v425
    %v427 = vrot.slane %v426, 2
    %v428 = vadd.f32 %v426, %v427
    %v429 = vrot.slane %v428, 1
    %v430 = vadd.f32 %v428, %v429
    %v431 = vadd.f32 %v424, %v234
    %v432 = vadd.f32 %v430, %v234
    %v433 = vxor.u32 %v431, 2147483648
    %v434 = vxor.u32 %v432, 2147483648
    %v435 = vmul.f32 %v433, 1.442695
    %v436 = vpow.pop %v435
    %v437 = vmul.f32 %v434, 1.442695
    %v438 = vpow.pop %v437
    %v439 = vadd.f32 %v436, 1.0
    %v440 = vadd.f32 %v438, 1.0
    %v441 = vrcp.pop %v439
    %v442 = vmul.f32 1.0, %v441
    %v443 = vrcp.pop %v440
    %v444 = vmul.f32 1.0, %v443
    %v447 = vcombine.low %v442, %v444
    %v449 = vmul.f32 %v256, %v447
    %s450 = scalar_lea.vmem [#allocation3], 8
    %451 = vst [vmem:[%s450] sm:$0xff] %v449
    // Predicated region
    $region30: #{tpu_custom_call.1} parent=1 // pred_check
      _
    $region31: #{tpu_custom_call.1} parent=1 // pred_check_branch
      %453 = sbr.rel (0) target = $region33
    $region32: #{tpu_custom_call.1} parent=1 // pred_region
      %s455 = ssub.s32 256, 256
      %456 = vsyncadd [#allocation4], %s455
      %s457 = sshll.u32 [#allocation3], 4
      %s458 = int_to_ptr.vmem [resolvable:$true] %s457
      %463 = dma.vmem_to_hbm [thread:$0]  %s458, 256, %s7, [#allocation4], 128, 128, 8
    $region33: #{tpu_custom_call.1} parent=1 // pred_fallthru
      _
    // Predicated region
    $region34: #{tpu_custom_call.1} parent=1 // pred_check
      _
    $region35: #{tpu_custom_call.1} parent=1 // pred_check_branch
      %465 = sbr.rel (0) target = $region37
    $region36: #{tpu_custom_call.1} parent=1 // pred_region
      %466 = dma.done [#allocation4], 256
    $region37: #{tpu_custom_call.1} parent=1 // pred_fallthru
      _
    %467 = vsyncpa [#allocation4], 1

</llo_original>
